<compile_context>
chip_gen: v6e
topology: v6e:2x2x1
jax: 0.10.0
libtpu: 0.0.40
codegen_flags: <defaults>
</compile_context>

<pallas_src>
import functools

import jax
import jax.numpy as jnp
from jax.experimental import pallas as pl
from jax.experimental.pallas import tpu as pltpu

HIDDEN = 128          # hidden_units in the PyTorch module
OUT_LANES = 128       # lane-dense packed output width (mu | v | zero pad)


def net_kernel(s_ref, w1_ref, b1_ref, w2_ref, b2_ref, wh_ref, bh_ref,
               scale_ref, offset_ref, out_ref, *, action_size):
    s = s_ref[...]                                             # (tb, obs) bf16

    # fused layer-1: [critic | actor] -> (tb, 2H)
    h = jnp.dot(s, w1_ref[...], preferred_element_type=jnp.float32) + b1_ref[...]
    h = jnp.maximum(h, 0.0)

    # fused layer-2: block-diag(w2c, w2a) -> (tb, 2H)
    # (single 256x256 MXU pass on v6e/v7x; slightly wasteful on v5e's 128x128)
    h = jnp.dot(h.astype(jnp.bfloat16), w2_ref[...],
                preferred_element_type=jnp.float32) + b2_ref[...]
    h = jnp.maximum(h, 0.0)

    # fused heads: [head_mu (actor half) | head_v (critic half) | 0] -> (tb, 128)
    raw = jnp.dot(h.astype(jnp.bfloat16), wh_ref[...],
                  preferred_element_type=jnp.float32) + bh_ref[...]

    # mu lanes get tanh * scale + offset; lane `action_size` is the raw value v;
    # remaining lanes are zero padding.
    lane = jax.lax.broadcasted_iota(jnp.int32, raw.shape, 1)
    mu = jnp.tanh(raw) * scale_ref[...] + offset_ref[...]
    out_ref[...] = jnp.where(lane < action_size, mu, raw)


def _pack_params(p):
    """Fuse the per-branch weights into MXU-friendly wide operands."""
    A = p["w_mu"].shape[1]
    H = HIDDEN

    w1 = jnp.concatenate([p["w1c"], p["w1a"]], axis=1).astype(jnp.bfloat16)
    b1 = jnp.concatenate([p["b1c"], p["b1a"]], axis=1).astype(jnp.float32)

    w2 = jnp.zeros((2 * H, 2 * H), jnp.float32)
    w2 = w2.at[:H, :H].set(p["w2c"]).at[H:, H:].set(p["w2a"])
    w2 = w2.astype(jnp.bfloat16)
    b2 = jnp.concatenate([p["b2c"], p["b2a"]], axis=1).astype(jnp.float32)

    wh = jnp.zeros((2 * H, OUT_LANES), jnp.float32)
    wh = wh.at[H:, :A].set(p["w_mu"])          # mu head reads actor hidden
    wh = wh.at[:H, A].set(p["w_v"][:, 0])      # v  head reads critic hidden
    wh = wh.astype(jnp.bfloat16)
    bh = jnp.zeros((1, OUT_LANES), jnp.float32).at[0, A].set(p["b_v"][0, 0])

    scale = jnp.zeros((1, OUT_LANES), jnp.float32).at[0, :A].set(p["mu_scale"][0])
    offset = jnp.zeros((1, OUT_LANES), jnp.float32).at[0, :A].set(p["mu_offset"][0])

    return (w1, b1, w2, b2, wh, bh, scale, offset), A


def net_forward(states, params, *, block_b=256):
    B, obs = states.shape
    packed, A = _pack_params(params)

    # pad batch to a sublane-aligned multiple of the batch tile
    b_pad = max(8, -(-B // 8) * 8)
    tb = min(block_b, b_pad)
    b_pad = -(-b_pad // tb) * tb
    s = jnp.zeros((b_pad, obs), jnp.bfloat16).at[:B].set(
        states.astype(jnp.bfloat16))

    grid = (b_pad // tb,)

    in_specs = [pl.BlockSpec((tb, obs), lambda i: (i, 0))] + [
        pl.BlockSpec(a.shape, lambda i: (0, 0)) for a in packed   # VMEM-resident
    ]
    out_specs = pl.BlockSpec((tb, OUT_LANES), lambda i: (i, 0))
    out_shape = jax.ShapeDtypeStruct((b_pad, OUT_LANES), jnp.float32)

    flops = 2 * b_pad * (obs * 2 * HIDDEN
                         + (2 * HIDDEN) * (2 * HIDDEN)
                         + (2 * HIDDEN) * OUT_LANES)
    bytes_accessed = (s.size * s.dtype.itemsize
                      + sum(a.size * a.dtype.itemsize for a in packed)
                      + b_pad * OUT_LANES * 4)
    cost = pl.CostEstimate(flops=flops,
                           transcendentals=b_pad * OUT_LANES,
                           bytes_accessed=bytes_accessed)

    out = pl.pallas_call(
        functools.partial(net_kernel, action_size=A),
        grid=grid,
        in_specs=in_specs,
        out_specs=out_specs,
        out_shape=out_shape,
        compiler_params=pltpu.CompilerParams(
            dimension_semantics=("parallel",)),
        cost_estimate=cost,
    )(s, *packed)

    mu = out[:B, :A]
    v = out[:B, A:A + 1]
    # variance = softplus(head_variance) is batch-independent: compute in the
    # wrapper once and broadcast (no per-batch work, no masked kernel store).
    var = jnp.broadcast_to(jax.nn.softplus(params["head_variance"]), (B, A))
    return mu, var, v


def net_forward_ref(states, p):
    """Pure-JAX (f32) reference matching the PyTorch module."""
    hc = jax.nn.relu(states @ p["w1c"] + p["b1c"])
    hc = jax.nn.relu(hc @ p["w2c"] + p["b2c"])
    v = hc @ p["w_v"] + p["b_v"]
    ha = jax.nn.relu(states @ p["w1a"] + p["b1a"])
    ha = jax.nn.relu(ha @ p["w2a"] + p["b2a"])
    mu = jnp.tanh(ha @ p["w_mu"]) * p["mu_scale"] + p["mu_offset"]
    var = jnp.broadcast_to(jax.nn.softplus(p["head_variance"]),
                           (states.shape[0], p["w_mu"].shape[1]))
    return mu, var, v


def init_params(key, obs_dim, action_size):
    ks = jax.random.split(key, 8)

    def lin(k, fan_in, fan_out):
        lim = 1.0 / jnp.sqrt(fan_in)
        return jax.random.uniform(k, (fan_in, fan_out), jnp.float32, -lim, lim)

    # deterministic Box(low, high) bounds of size action_size
    low = jnp.array([-1.0, -2.0, 0.0, -0.5], dtype=jnp.float32)[:action_size]
    high = jnp.array([1.0, 2.0, 4.0, 1.5], dtype=jnp.float32)[:action_size]

    return {
        "w1c": lin(ks[0], obs_dim, HIDDEN),
        "b1c": jnp.zeros((1, HIDDEN), jnp.float32),
        "w2c": lin(ks[1], HIDDEN, HIDDEN),
        "b2c": jnp.zeros((1, HIDDEN), jnp.float32),
        "w_v": lin(ks[2], HIDDEN, 1),
        "b_v": jnp.zeros((1, 1), jnp.float32),
        "w1a": lin(ks[3], obs_dim, HIDDEN),
        "b1a": jnp.zeros((1, HIDDEN), jnp.float32),
        "w2a": lin(ks[4], HIDDEN, HIDDEN),
        "b2a": jnp.zeros((1, HIDDEN), jnp.float32),
        "w_mu": lin(ks[5], HIDDEN, action_size),          # head_mu has no bias
        "mu_scale": ((high - low) / 2.0).reshape(1, action_size),
        "mu_offset": ((high + low) / 2.0).reshape(1, action_size),
        "head_variance": jnp.zeros((1, action_size), jnp.float32),
    }


if __name__ == "__main__":
    B, OBS, A = 8, 32, 4
    key = jax.random.PRNGKey(0)
    k_states, k_params = jax.random.split(key)

    states = jax.random.normal(k_states, (B, OBS), dtype=jnp.float32)
    params = init_params(k_params, OBS, A)

    mu, var, v = jax.block_until_ready(net_forward(states, params))
    mu_r, var_r, v_r = net_forward_ref(states, params)

    assert mu.shape == (B, A) and var.shape == (B, A) and v.shape == (B, 1)
    # bf16 weights/activations -> loosened tolerances vs f32 reference
    assert jnp.allclose(mu, mu_r, atol=3e-2, rtol=3e-2)
    assert jnp.allclose(v, v_r, atol=3e-2, rtol=3e-2)
    # variance path is exact f32 in the wrapper
    assert jnp.allclose(var, var_r, atol=1e-6, rtol=1e-6)

    print("KERNEL_OK")
</pallas_src>

<mosaic_0001>
module attributes {stable_mosaic.version = 11 : i64} {
  func.func @net_kernel(%arg0: i32, %arg1: memref<8x32xbf16, #tpu.memory_space<vmem>>, %arg2: memref<32x256xbf16, #tpu.memory_space<vmem>>, %arg3: memref<1x256xf32, #tpu.memory_space<vmem>>, %arg4: memref<256x256xbf16, #tpu.memory_space<vmem>>, %arg5: memref<1x256xf32, #tpu.memory_space<vmem>>, %arg6: memref<256x128xbf16, #tpu.memory_space<vmem>>, %arg7: memref<1x128xf32, #tpu.memory_space<vmem>>, %arg8: memref<1x128xf32, #tpu.memory_space<vmem>>, %arg9: memref<1x128xf32, #tpu.memory_space<vmem>>, %arg10: memref<8x128xf32, #tpu.memory_space<vmem>>) attributes {dimension_semantics = [#tpu.dimension_semantics<parallel>], iteration_bounds = array<i64: 1>, scalar_prefetch = 0 : i64, scratch_operands = 0 : i64, tpu.core_type = #tpu.core_type<tc>, window_params = [{transform_indices = @transform_0, window_bounds = array<i64: 8, 32>}, {pipeline_mode = #tpu.pipeline_mode<synchronous>, transform_indices = @transform_1, window_bounds = array<i64: 32, 256>}, {pipeline_mode = #tpu.pipeline_mode<synchronous>, transform_indices = @transform_2, window_bounds = array<i64: 1, 256>}, {pipeline_mode = #tpu.pipeline_mode<synchronous>, transform_indices = @transform_3, window_bounds = array<i64: 256, 256>}, {pipeline_mode = #tpu.pipeline_mode<synchronous>, transform_indices = @transform_4, window_bounds = array<i64: 1, 256>}, {pipeline_mode = #tpu.pipeline_mode<synchronous>, transform_indices = @transform_5, window_bounds = array<i64: 256, 128>}, {pipeline_mode = #tpu.pipeline_mode<synchronous>, transform_indices = @transform_6, window_bounds = array<i64: 1, 128>}, {pipeline_mode = #tpu.pipeline_mode<synchronous>, transform_indices = @transform_7, window_bounds = array<i64: 1, 128>}, {pipeline_mode = #tpu.pipeline_mode<synchronous>, transform_indices = @transform_8, window_bounds = array<i64: 1, 128>}, {transform_indices = @transform_9, window_bounds = array<i64: 8, 128>}]} {
    %c0 = arith.constant 0 : index
    %c0_0 = arith.constant 0 : index
    %0 = vector.load %arg1[%c0, %c0_0] : memref<8x32xbf16, #tpu.memory_space<vmem>>, vector<8x32xbf16>
    %c0_1 = arith.constant 0 : index
    %c0_2 = arith.constant 0 : index
    %1 = vector.load %arg2[%c0_1, %c0_2] : memref<32x256xbf16, #tpu.memory_space<vmem>>, vector<32x256xbf16>
    %cst = arith.constant dense<0.000000e+00> : vector<8x256xf32>
    %2 = tpu.matmul %0, %1, %cst {dimension_numbers = #tpu.dot_dimension_numbers<[1], [0], [0], [1], [0, 0, 1, 1], [], []>} : vector<8x32xbf16>, vector<32x256xbf16>, vector<8x256xf32> -> vector<8x256xf32>
    %c0_3 = arith.constant 0 : index
    %c0_4 = arith.constant 0 : index
    %3 = vector.load %arg3[%c0_3, %c0_4] : memref<1x256xf32, #tpu.memory_space<vmem>>, vector<1x256xf32>
    %4 = vector.broadcast %3 : vector<1x256xf32> to vector<8x256xf32>
    %5 = arith.addf %2, %4 : vector<8x256xf32>
    %cst_5 = arith.constant 0.000000e+00 : f32
    %6 = vector.broadcast %cst_5 : f32 to vector<8x256xf32>
    %7 = arith.maximumf %5, %6 : vector<8x256xf32>
    %8 = arith.truncf %7 : vector<8x256xf32> to vector<8x256xbf16>
    %c0_6 = arith.constant 0 : index
    %c0_7 = arith.constant 0 : index
    %9 = vector.load %arg4[%c0_6, %c0_7] : memref<256x256xbf16, #tpu.memory_space<vmem>>, vector<256x256xbf16>
    %cst_8 = arith.constant dense<0.000000e+00> : vector<8x256xf32>
    %10 = tpu.matmul %8, %9, %cst_8 {dimension_numbers = #tpu.dot_dimension_numbers<[1], [0], [0], [1], [0, 0, 1, 1], [], []>} : vector<8x256xbf16>, vector<256x256xbf16>, vector<8x256xf32> -> vector<8x256xf32>
    %c0_9 = arith.constant 0 : index
    %c0_10 = arith.constant 0 : index
    %11 = vector.load %arg5[%c0_9, %c0_10] : memref<1x256xf32, #tpu.memory_space<vmem>>, vector<1x256xf32>
    %12 = vector.broadcast %11 : vector<1x256xf32> to vector<8x256xf32>
    %13 = arith.addf %10, %12 : vector<8x256xf32>
    %cst_11 = arith.constant 0.000000e+00 : f32
    %14 = vector.broadcast %cst_11 : f32 to vector<8x256xf32>
    %15 = arith.maximumf %13, %14 : vector<8x256xf32>
    %16 = arith.truncf %15 : vector<8x256xf32> to vector<8x256xbf16>
    %c0_12 = arith.constant 0 : index
    %c0_13 = arith.constant 0 : index
    %17 = vector.load %arg6[%c0_12, %c0_13] : memref<256x128xbf16, #tpu.memory_space<vmem>>, vector<256x128xbf16>
    %cst_14 = arith.constant dense<0.000000e+00> : vector<8x128xf32>
    %18 = tpu.matmul %16, %17, %cst_14 {dimension_numbers = #tpu.dot_dimension_numbers<[1], [0], [0], [1], [0, 0, 1, 1], [], []>} : vector<8x256xbf16>, vector<256x128xbf16>, vector<8x128xf32> -> vector<8x128xf32>
    %c0_15 = arith.constant 0 : index
    %c0_16 = arith.constant 0 : index
    %19 = vector.load %arg7[%c0_15, %c0_16] : memref<1x128xf32, #tpu.memory_space<vmem>>, vector<1x128xf32>
    %20 = vector.broadcast %19 : vector<1x128xf32> to vector<8x128xf32>
    %21 = arith.addf %18, %20 : vector<8x128xf32>
    %22 = tpu.iota {dimensions = array<i32: 1>} : vector<8x128xi32>
    %23 = math.tanh %21 : vector<8x128xf32>
    %c0_17 = arith.constant 0 : index
    %c0_18 = arith.constant 0 : index
    %24 = vector.load %arg8[%c0_17, %c0_18] : memref<1x128xf32, #tpu.memory_space<vmem>>, vector<1x128xf32>
    %25 = vector.broadcast %24 : vector<1x128xf32> to vector<8x128xf32>
    %26 = arith.mulf %23, %25 : vector<8x128xf32>
    %c0_19 = arith.constant 0 : index
    %c0_20 = arith.constant 0 : index
    %27 = vector.load %arg9[%c0_19, %c0_20] : memref<1x128xf32, #tpu.memory_space<vmem>>, vector<1x128xf32>
    %28 = vector.broadcast %27 : vector<1x128xf32> to vector<8x128xf32>
    %29 = arith.addf %26, %28 : vector<8x128xf32>
    %c4_i32 = arith.constant 4 : i32
    %30 = vector.broadcast %c4_i32 : i32 to vector<8x128xi32>
    %31 = arith.cmpi slt, %22, %30 : vector<8x128xi32>
    %32 = arith.select %31, %29, %21 : vector<8x128xi1>, vector<8x128xf32>
    %c0_21 = arith.constant 0 : index
    %c0_22 = arith.constant 0 : index
    %33 = vector.load %arg10[%c0_21, %c0_22] : memref<8x128xf32, #tpu.memory_space<vmem>>, vector<8x128xf32>
    tpu.vector_store %arg10[%c0_21, %c0_22], %32 {strides = array<i32>} : memref<8x128xf32, #tpu.memory_space<vmem>>, vector<8x128xf32>,
    return
  }
  func.func @transform_0(%arg0: i32) -> (i32, i32) {
    %c0_i32 = arith.constant 0 : i32
    %c0_i32_0 = arith.constant 0 : i32
    return %arg0, %c0_i32 : i32, i32
  }
  func.func @transform_1(%arg0: i32) -> (i32, i32) {
    %c0_i32 = arith.constant 0 : i32
    %c0_i32_0 = arith.constant 0 : i32
    %c0_i32_1 = arith.constant 0 : i32
    return %c0_i32, %c0_i32_0 : i32, i32
  }
  func.func @transform_2(%arg0: i32) -> (i32, i32) {
    %c0_i32 = arith.constant 0 : i32
    %c0_i32_0 = arith.constant 0 : i32
    %c0_i32_1 = arith.constant 0 : i32
    return %c0_i32, %c0_i32_0 : i32, i32
  }
  func.func @transform_3(%arg0: i32) -> (i32, i32) {
    %c0_i32 = arith.constant 0 : i32
    %c0_i32_0 = arith.constant 0 : i32
    %c0_i32_1 = arith.constant 0 : i32
    return %c0_i32, %c0_i32_0 : i32, i32
  }
  func.func @transform_4(%arg0: i32) -> (i32, i32) {
    %c0_i32 = arith.constant 0 : i32
    %c0_i32_0 = arith.constant 0 : i32
    %c0_i32_1 = arith.constant 0 : i32
    return %c0_i32, %c0_i32_0 : i32, i32
  }
  func.func @transform_5(%arg0: i32) -> (i32, i32) {
    %c0_i32 = arith.constant 0 : i32
    %c0_i32_0 = arith.constant 0 : i32
    %c0_i32_1 = arith.constant 0 : i32
    return %c0_i32, %c0_i32_0 : i32, i32
  }
  func.func @transform_6(%arg0: i32) -> (i32, i32) {
    %c0_i32 = arith.constant 0 : i32
    %c0_i32_0 = arith.constant 0 : i32
    %c0_i32_1 = arith.constant 0 : i32
    return %c0_i32, %c0_i32_0 : i32, i32
  }
  func.func @transform_7(%arg0: i32) -> (i32, i32) {
    %c0_i32 = arith.constant 0 : i32
    %c0_i32_0 = arith.constant 0 : i32
    %c0_i32_1 = arith.constant 0 : i32
    return %c0_i32, %c0_i32_0 : i32, i32
  }
  func.func @transform_8(%arg0: i32) -> (i32, i32) {
    %c0_i32 = arith.constant 0 : i32
    %c0_i32_0 = arith.constant 0 : i32
    %c0_i32_1 = arith.constant 0 : i32
    return %c0_i32, %c0_i32_0 : i32, i32
  }
  func.func @transform_9(%arg0: i32) -> (i32, i32) {
    %c0_i32 = arith.constant 0 : i32
    %c0_i32_0 = arith.constant 0 : i32
    return %arg0, %c0_i32 : i32, i32
  }
}

</mosaic_0001>

<llo_original>
// kernel: tpu_custom_call.1
$region0: #{tpu_custom_call.1}
  #allocation0 [shape = 'u32[]', space=smem, size = 0x4, offset = 0x4, fixed_abs, tag = 'smem constant byte address 0x4 - core index']
  #allocation1 [shape = 'u32[144,128]{1,0:T(1,128)}', space=vmem, size = 0x12000, scoped, tag = 'internal scratch']
  %s0 = inlined_call_operand.hbm [shape: bf16[8,32], index: 0, kind: input, shape index: {}]
  %s1 = inlined_call_operand.hbm [shape: bf16[32,256], index: 1, kind: input, shape index: {}]
  %s2 = inlined_call_operand.vmem [shape: f32[1,256], index: 2, kind: input, shape index: {}]
  %s3 = inlined_call_operand.hbm [shape: bf16[256,256], index: 3, kind: input, shape index: {}]
  %s4 = inlined_call_operand.vmem [shape: f32[1,256], index: 4, kind: input, shape index: {}]
  %s5 = inlined_call_operand.hbm [shape: bf16[256,128], index: 5, kind: input, shape index: {}]
  %s6 = inlined_call_operand.vmem [shape: f32[1,128], index: 6, kind: input, shape index: {}]
  %s7 = inlined_call_operand.vmem [shape: f32[1,128], index: 7, kind: input, shape index: {}]
  %s8 = inlined_call_operand.vmem [shape: f32[1,128], index: 8, kind: input, shape index: {}]
  %s9 = inlined_call_operand.hbm [shape: f32[8,128], index: 9, kind: output, shape index: {}]
  %s10 = sld [smem:[#allocation0]]
  $region62: #{tpu_custom_call.1} parent=0
    _
  %s12 = ssub.s32 1, %s10
  %s13 = scalar_select 0, %s12, %s10
  $region1: #{tpu_custom_call.1} parent=0
    #allocation2 [shape = 'u8[2048]{0}', space=vmem, size = 0x800, scoped, tag = 'input window, operand 0, single buffered']
    #allocation3 [shape = 's32[1]{0}', space=sflag, size = 0x4, scoped, tag = 'scoped memory for tpu_custom_call.1']
    #allocation4 [shape = 's32[1]{0}', space=sflag, size = 0x4, scoped, tag = 'scoped memory for tpu_custom_call.1']
    #allocation5 [shape = 'u8[16384]{0}', space=vmem, size = 0x4000, scoped, tag = 'input window, operand 1, single buffered']
    #allocation6 [shape = 's32[1]{0}', space=sflag, size = 0x4, scoped, tag = 'scoped memory for tpu_custom_call.1']
    #allocation7 [shape = 'u8[131072]{0}', space=vmem, size = 0x20000, scoped, tag = 'input window, operand 3, single buffered']
    #allocation8 [shape = 'u8[65536]{0}', space=vmem, size = 0x10000, scoped, tag = 'input window, operand 5, single buffered']
    #allocation9 [shape = 's32[1]{0}', space=sflag, size = 0x4, scoped, tag = 'scoped memory for tpu_custom_call.1']
    #allocation10 [shape = 'u8[4096]{0}', space=vmem, size = 0x1000, scoped, tag = 'output window, operand 0, single buffered']
    %14 = vsyncpa [#allocation3], 0
    %15 = vsyncpa [#allocation6], 0
    %16 = vsyncpa [#allocation9], 0
    %17 = vsyncpa [#allocation4], 0
    // Predicated region
    $region2: #{tpu_custom_call.1} parent=1 // pred_check
      _
    $region3: #{tpu_custom_call.1} parent=1 // pred_check_branch
      %19 = sbr.rel (0) target = $region5
    $region4: #{tpu_custom_call.1} parent=1 // pred_region
      %s21 = ssub.s32 64, 64
      %22 = vsyncadd [#allocation3], %s21
      %s24 = sshll.u32 [#allocation2], 4
      %s25 = int_to_ptr.vmem [resolvable:$true] %s24
      %27 = dma.hbm_to_vmem [thread:$0]  %s0, 64, %s25, [#allocation3]
    $region5: #{tpu_custom_call.1} parent=1 // pred_fallthru
      _
    // Predicated region
    $region6: #{tpu_custom_call.1} parent=1 // pred_check
      _
    $region7: #{tpu_custom_call.1} parent=1 // pred_check_branch
      %29 = sbr.rel (0) target = $region9
    $region8: #{tpu_custom_call.1} parent=1 // pred_region
      %s31 = ssub.s32 512, 512
      %32 = vsyncadd [#allocation6], %s31
      %s33 = sshll.u32 [#allocation5], 4
      %s34 = int_to_ptr.vmem [resolvable:$true] %s33
      %39 = dma.hbm_to_vmem [thread:$0]  %s1, 512, %s34, [#allocation6], 128, 128, 8
    $region9: #{tpu_custom_call.1} parent=1 // pred_fallthru
      _
    // Predicated region
    $region10: #{tpu_custom_call.1} parent=1 // pred_check
      _
    $region11: #{tpu_custom_call.1} parent=1 // pred_check_branch
      %41 = sbr.rel (0) target = $region13
    $region12: #{tpu_custom_call.1} parent=1 // pred_region
      _
    $region13: #{tpu_custom_call.1} parent=1 // pred_fallthru
      _
    // Predicated region
    $region14: #{tpu_custom_call.1} parent=1 // pred_check
      _
    $region15: #{tpu_custom_call.1} parent=1 // pred_check_branch
      %43 = sbr.rel (0) target = $region17
    $region16: #{tpu_custom_call.1} parent=1 // pred_region
      %s45 = ssub.s32 4096, 4096
      %46 = vsyncadd [#allocation6], %s45
      %s47 = sshll.u32 [#allocation7], 4
      %s48 = int_to_ptr.vmem [resolvable:$true] %s47
      %53 = dma.hbm_to_vmem [thread:$0]  %s3, 4096, %s48, [#allocation6], 128, 128, 8
    $region17: #{tpu_custom_call.1} parent=1 // pred_fallthru
      _
    // Predicated region
    $region18: #{tpu_custom_call.1} parent=1 // pred_check
      _
    $region19: #{tpu_custom_call.1} parent=1 // pred_check_branch
      %55 = sbr.rel (0) target = $region21
    $region20: #{tpu_custom_call.1} parent=1 // pred_region
      _
    $region21: #{tpu_custom_call.1} parent=1 // pred_fallthru
      _
    // Predicated region
    $region22: #{tpu_custom_call.1} parent=1 // pred_check
      _
    $region23: #{tpu_custom_call.1} parent=1 // pred_check_branch
      %57 = sbr.rel (0) target = $region25
    $region24: #{tpu_custom_call.1} parent=1 // pred_region
      %s59 = ssub.s32 2048, 2048
      %60 = vsyncadd [#allocation9], %s59
      %s61 = sshll.u32 [#allocation8], 4
      %s62 = int_to_ptr.vmem [resolvable:$true] %s61
      %67 = dma.hbm_to_vmem [thread:$0]  %s5, 2048, %s62, [#allocation9], 64, 64, 4
    $region25: #{tpu_custom_call.1} parent=1 // pred_fallthru
      _
    // Predicated region
    $region26: #{tpu_custom_call.1} parent=1 // pred_check
      _
    $region27: #{tpu_custom_call.1} parent=1 // pred_check_branch
      %69 = sbr.rel (0) target = $region29
    $region28: #{tpu_custom_call.1} parent=1 // pred_region
      _
    $region29: #{tpu_custom_call.1} parent=1 // pred_fallthru
      _
    // Predicated region
    $region30: #{tpu_custom_call.1} parent=1 // pred_check
      _
    $region31: #{tpu_custom_call.1} parent=1 // pred_check_branch
      %71 = sbr.rel (0) target = $region33
    $region32: #{tpu_custom_call.1} parent=1 // pred_region
      _
    $region33: #{tpu_custom_call.1} parent=1 // pred_fallthru
      _
    // Predicated region
    $region34: #{tpu_custom_call.1} parent=1 // pred_check
      _
    $region35: #{tpu_custom_call.1} parent=1 // pred_check_branch
      %73 = sbr.rel (0) target = $region37
    $region36: #{tpu_custom_call.1} parent=1 // pred_region
      _
    $region37: #{tpu_custom_call.1} parent=1 // pred_fallthru
      _
    // Predicated region
    $region38: #{tpu_custom_call.1} parent=1 // pred_check
      _
    $region39: #{tpu_custom_call.1} parent=1 // pred_check_branch
      %75 = sbr.rel (0) target = $region41
    $region40: #{tpu_custom_call.1} parent=1 // pred_region
      %76 = dma.done [#allocation3], 64
    $region41: #{tpu_custom_call.1} parent=1 // pred_fallthru
      _
    // Predicated region
    $region42: #{tpu_custom_call.1} parent=1 // pred_check
      _
    $region43: #{tpu_custom_call.1} parent=1 // pred_check_branch
      %78 = sbr.rel (0) target = $region45
    $region44: #{tpu_custom_call.1} parent=1 // pred_region
      %79 = dma.done [#allocation6], 512
    $region45: #{tpu_custom_call.1} parent=1 // pred_fallthru
      _
    // Predicated region
    $region46: #{tpu_custom_call.1} parent=1 // pred_check
      _
    $region47: #{tpu_custom_call.1} parent=1 // pred_check_branch
      %81 = sbr.rel (0) target = $region49
    $region48: #{tpu_custom_call.1} parent=1 // pred_region
      %82 = dma.done [#allocation6], 4096
    $region49: #{tpu_custom_call.1} parent=1 // pred_fallthru
      _
    // Predicated region
    $region50: #{tpu_custom_call.1} parent=1 // pred_check
      _
    $region51: #{tpu_custom_call.1} parent=1 // pred_check_branch
      %84 = sbr.rel (0) target = $region53
    $region52: #{tpu_custom_call.1} parent=1 // pred_region
      %85 = dma.done [#allocation9], 2048
    $region53: #{tpu_custom_call.1} parent=1 // pred_fallthru
      _
    %v87 = vld [vmem:[#allocation2] sm:$0xf]
    %v88 = vld [vmem:[#allocation5] sm:$0xff]
    %v89 = vld [vmem:[#allocation5 + $0x8] sm:$0xff]
    %v90 = vld [vmem:[#allocation5 + $0x10] sm:$0xff]
    %v91 = vld [vmem:[#allocation5 + $0x18] sm:$0xff]
    %v92 = vld [vmem:[%s2] sm:$0x3]
    %v94 = vlaneseq
    %v95 = vshrl.u32 %v94, 7
    %v96 = vsub.s32 0, %v95
    %v97 = vrot.slane %v92, %v96
    %v98 = vlaneseq
    %v99 = vshrl.u32 %v98, 7
    %v100 = vsub.s32 1, %v99
    %v101 = vrot.slane %v92, %v100
    %v108 = vunpack.c.l.b16 %v88
    %v109 = vunpack.c.h.b16 %v88
    %v110 = vunpack.c.l.b16 %v89
    %v111 = vunpack.c.h.b16 %v89
    %v112 = vunpack.c.l.b16 %v90
    %v113 = vunpack.c.h.b16 %v90
    %v114 = vunpack.c.l.b16 %v91
    %v115 = vunpack.c.h.b16 %v91
    %v116 = vpack.c.b16 %v110, %v108
    %v117 = vpack.c.b16 %v111, %v109
    %v118 = vpack.c.b16 %v114, %v112
    %v119 = vpack.c.b16 %v115, %v113
    %vm124 = vcmask 261120
    %v126 = vsel %vm124, %v87, 0
    %128 = vmatprep.subr.bf16.mxu0 0
    %129 = vmatpush1.bf16.msra.mxu0 0
    %130 = vmatprep.subr.bf16.mxu0 0
    %131 = vmatpush1.bf16.msra.mxu0 0
    %132 = vmatprep.subr.bf16.mxu0 0
    %133 = vmatpush1.bf16.msra.mxu0 0
    %134 = vmatprep.subr.bf16.mxu0 0
    %135 = vmatpush1.bf16.msra.mxu0 0
    %136 = vmatprep.subr.bf16.mxu0 0
    %137 = vmatpush1.bf16.msra.mxu0 0
    %138 = vmatprep.subr.bf16.mxu0 0
    %139 = vmatpush1.bf16.msra.mxu0 0
    %140 = vmatprep.subr.bf16.mxu0 %v119
    %141 = vmatpush1.bf16.msra.mxu0 %v118
    %142 = vmatprep.subr.bf16.mxu0 %v117
    %143 = vmatpush1.bf16.msra.mxu0 %v116
    %144 = vmatprep.subr.bf16.mxu0 0
    %145 = vmatpush2.bf16.msra.mxu0 0
    %146 = vmatprep.subr.bf16.mxu0 0
    %147 = vmatpush2.bf16.msra.mxu0 0
    %148 = vmatprep.subr.bf16.mxu0 0
    %149 = vmatpush2.bf16.msra.mxu0 0
    %150 = vmatprep.subr.bf16.mxu0 0
    %151 = vmatpush2.bf16.msra.mxu0 0
    %152 = vmatprep.subr.bf16.mxu0 0
    %153 = vmatpush2.bf16.msra.mxu0 0
    %154 = vmatprep.subr.bf16.mxu0 0
    %155 = vmatpush2.bf16.msra.mxu0 0
    %156 = vmatprep.subr.bf16.mxu0 0
    %157 = vmatpush2.bf16.msra.mxu0 0
    %158 = vmatprep.subr.bf16.mxu0 0
    %159 = vmatpush2.bf16.msra.mxu0 0
    %160 = vmatprep.mubr.bf16.mxu0 0
    %161 = vmatmul.mubr.bf16.gmra.mxu0 %v126
    %v162 = vpop.f32.mrf.mxu0
    %v163 = vadd.f32 %v97, %v162
    %v164 = vpop.f32.mrf.mxu0
    %v165 = vadd.f32 %v101, %v164
    %v166 = vpop.f32.mrf.mxu0
    %v167 = vpop.f32.mrf.mxu0
    %168 = vdwg.mxu0
    %v169 = vmax.f32 %v163, 0.0
    %v170 = vmax.f32 %v165, 0.0
    %v171 = vpack.c.bf16 %v169, %v169
    %v172 = vpack.c.bf16 %v170, %v170
    %v173 = vld [vmem:[#allocation7] sm:$0xff]
    %v174 = vld [vmem:[#allocation7 + $0x8] sm:$0xff]
    %v175 = vld [vmem:[#allocation7 + $0x10] sm:$0xff]
    %v176 = vld [vmem:[#allocation7 + $0x18] sm:$0xff]
    %v177 = vld [vmem:[#allocation7 + $0x20] sm:$0xff]
    %v178 = vld [vmem:[#allocation7 + $0x28] sm:$0xff]
    %v179 = vld [vmem:[#allocation7 + $0x30] sm:$0xff]
    %v180 = vld [vmem:[#allocation7 + $0x38] sm:$0xff]
    %v181 = vld [vmem:[#allocation7 + $0x40] sm:$0xff]
    %v182 = vld [vmem:[#allocation7 + $0x48] sm:$0xff]
    %v183 = vld [vmem:[#allocation7 + $0x50] sm:$0xff]
    %v184 = vld [vmem:[#allocation7 + $0x58] sm:$0xff]
    %v185 = vld [vmem:[#allocation7 + $0x60] sm:$0xff]
    %v186 = vld [vmem:[#allocation7 + $0x68] sm:$0xff]
    %v187 = vld [vmem:[#allocation7 + $0x70] sm:$0xff]
    %v188 = vld [vmem:[#allocation7 + $0x78] sm:$0xff]
    %v189 = vld [vmem:[#allocation7 + $0x80] sm:$0xff]
    %v190 = vld [vmem:[#allocation7 + $0x88] sm:$0xff]
    %v191 = vld [vmem:[#allocation7 + $0x90] sm:$0xff]
    %v192 = vld [vmem:[#allocation7 + $0x98] sm:$0xff]
    %v193 = vld [vmem:[#allocation7 + $0xa0] sm:$0xff]
    %v194 = vld [vmem:[#allocation7 + $0xa8] sm:$0xff]
    %v195 = vld [vmem:[#allocation7 + $0xb0] sm:$0xff]
    %v196 = vld [vmem:[#allocation7 + $0xb8] sm:$0xff]
    %v197 = vld [vmem:[#allocation7 + $0xc0] sm:$0xff]
    %v198 = vld [vmem:[#allocation7 + $0xc8] sm:$0xff]
    %v199 = vld [vmem:[#allocation7 + $0xd0] sm:$0xff]
    %v200 = vld [vmem:[#allocation7 + $0xd8] sm:$0xff]
    %v201 = vld [vmem:[#allocation7 + $0xe0] sm:$0xff]
    %v202 = vld [vmem:[#allocation7 + $0xe8] sm:$0xff]
    %v203 = vld [vmem:[#allocation7 + $0xf0] sm:$0xff]
    %v204 = vld [vmem:[#allocation7 + $0xf8] sm:$0xff]
    %v205 = vld [vmem:[%s4] sm:$0x3]
    %v207 = vlaneseq
    %v208 = vshrl.u32 %v207, 7
    %v209 = vsub.s32 0, %v208
    %v210 = vrot.slane %v205, %v209
    %v211 = vlaneseq
    %v212 = vshrl.u32 %v211, 7
    %v213 = vsub.s32 1, %v212
    %v214 = vrot.slane %v205, %v213
    %v249 = vunpack.c.l.b16 %v173
    %v250 = vunpack.c.h.b16 %v173
    %v251 = vunpack.c.l.b16 %v174
    %v252 = vunpack.c.h.b16 %v174
    %v253 = vunpack.c.l.b16 %v175
    %v254 = vunpack.c.h.b16 %v175
    %v255 = vunpack.c.l.b16 %v176
    %v256 = vunpack.c.h.b16 %v176
    %v257 = vunpack.c.l.b16 %v177
    %v258 = vunpack.c.h.b16 %v177
    %v259 = vunpack.c.l.b16 %v178
    %v260 = vunpack.c.h.b16 %v178
    %v261 = vunpack.c.l.b16 %v179
    %v262 = vunpack.c.h.b16 %v179
    %v263 = vunpack.c.l.b16 %v180
    %v264 = vunpack.c.h.b16 %v180
    %v265 = vunpack.c.l.b16 %v181
    %v266 = vunpack.c.h.b16 %v181
    %v267 = vunpack.c.l.b16 %v182
    %v268 = vunpack.c.h.b16 %v182
    %v269 = vunpack.c.l.b16 %v183
    %v270 = vunpack.c.h.b16 %v183
    %v271 = vunpack.c.l.b16 %v184
    %v272 = vunpack.c.h.b16 %v184
    %v273 = vunpack.c.l.b16 %v185
    %v274 = vunpack.c.h.b16 %v185
    %v275 = vunpack.c.l.b16 %v186
    %v276 = vunpack.c.h.b16 %v186
    %v277 = vunpack.c.l.b16 %v187
    %v278 = vunpack.c.h.b16 %v187
    %v279 = vunpack.c.l.b16 %v188
    %v280 = vunpack.c.h.b16 %v188
    %v281 = vunpack.c.l.b16 %v189
    %v282 = vunpack.c.h.b16 %v189
    %v283 = vunpack.c.l.b16 %v190
    %v284 = vunpack.c.h.b16 %v190
    %v285 = vunpack.c.l.b16 %v191
    %v286 = vunpack.c.h.b16 %v191
    %v287 = vunpack.c.l.b16 %v192
    %v288 = vunpack.c.h.b16 %v192
    %v289 = vunpack.c.l.b16 %v193
    %v290 = vunpack.c.h.b16 %v193
    %v291 = vunpack.c.l.b16 %v194
    %v292 = vunpack.c.h.b16 %v194
    %v293 = vunpack.c.l.b16 %v195
    %v294 = vunpack.c.h.b16 %v195
    %v295 = vunpack.c.l.b16 %v196
    %v296 = vunpack.c.h.b16 %v196
    %v297 = vunpack.c.l.b16 %v197
    %v298 = vunpack.c.h.b16 %v197
    %v299 = vunpack.c.l.b16 %v198
    %v300 = vunpack.c.h.b16 %v198
    %v301 = vunpack.c.l.b16 %v199
    %v302 = vunpack.c.h.b16 %v199
    %v303 = vunpack.c.l.b16 %v200
    %v304 = vunpack.c.h.b16 %v200
    %v305 = vunpack.c.l.b16 %v201
    %v306 = vunpack.c.h.b16 %v201
    %v307 = vunpack.c.l.b16 %v202
    %v308 = vunpack.c.h.b16 %v202
    %v309 = vunpack.c.l.b16 %v203
    %v310 = vunpack.c.h.b16 %v203
    %v311 = vunpack.c.l.b16 %v204
    %v312 = vunpack.c.h.b16 %v204
    %v313 = vpack.c.b16 %v251, %v249
    %v314 = vpack.c.b16 %v252, %v250
    %v315 = vpack.c.b16 %v255, %v253
    %v316 = vpack.c.b16 %v256, %v254
    %v317 = vpack.c.b16 %v259, %v257
    %v318 = vpack.c.b16 %v260, %v258
    %v319 = vpack.c.b16 %v263, %v261
    %v320 = vpack.c.b16 %v264, %v262
    %v321 = vpack.c.b16 %v267, %v265
    %v322 = vpack.c.b16 %v268, %v266
    %v323 = vpack.c.b16 %v271, %v269
    %v324 = vpack.c.b16 %v272, %v270
    %v325 = vpack.c.b16 %v275, %v273
    %v326 = vpack.c.b16 %v276, %v274
    %v327 = vpack.c.b16 %v279, %v277
    %v328 = vpack.c.b16 %v280, %v278
    %v329 = vpack.c.b16 %v283, %v281
    %v330 = vpack.c.b16 %v284, %v282
    %v331 = vpack.c.b16 %v287, %v285
    %v332 = vpack.c.b16 %v288, %v286
    %v333 = vpack.c.b16 %v291, %v289
    %v334 = vpack.c.b16 %v292, %v290
    %v335 = vpack.c.b16 %v295, %v293
    %v336 = vpack.c.b16 %v296, %v294
    %v337 = vpack.c.b16 %v299, %v297
    %v338 = vpack.c.b16 %v300, %v298
    %v339 = vpack.c.b16 %v303, %v301
    %v340 = vpack.c.b16 %v304, %v302
    %v341 = vpack.c.b16 %v307, %v305
    %v342 = vpack.c.b16 %v308, %v306
    %v343 = vpack.c.b16 %v311, %v309
    %v344 = vpack.c.b16 %v312, %v310
    %377 = vmatprep.subr.bf16.mxu0 %v328
    %378 = vmatpush1.bf16.msra.mxu0 %v327
    %379 = vmatprep.subr.bf16.mxu0 %v326
    %380 = vmatpush1.bf16.msra.mxu0 %v325
    %381 = vmatprep.subr.bf16.mxu0 %v324
    %382 = vmatpush1.bf16.msra.mxu0 %v323
    %383 = vmatprep.subr.bf16.mxu0 %v322
    %384 = vmatpush1.bf16.msra.mxu0 %v321
    %385 = vmatprep.subr.bf16.mxu0 %v320
    %386 = vmatpush1.bf16.msra.mxu0 %v319
    %387 = vmatprep.subr.bf16.mxu0 %v318
    %388 = vmatpush1.bf16.msra.mxu0 %v317
    %389 = vmatprep.subr.bf16.mxu0 %v316
    %390 = vmatpush1.bf16.msra.mxu0 %v315
    %391 = vmatprep.subr.bf16.mxu0 %v314
    %392 = vmatpush1.bf16.msra.mxu0 %v313
    %393 = vmatprep.subr.bf16.mxu0 %v344
    %394 = vmatpush2.bf16.msra.mxu0 %v343
    %395 = vmatprep.subr.bf16.mxu0 %v342
    %396 = vmatpush2.bf16.msra.mxu0 %v341
    %397 = vmatprep.subr.bf16.mxu0 %v340
    %398 = vmatpush2.bf16.msra.mxu0 %v339
    %399 = vmatprep.subr.bf16.mxu0 %v338
    %400 = vmatpush2.bf16.msra.mxu0 %v337
    %401 = vmatprep.subr.bf16.mxu0 %v336
    %402 = vmatpush2.bf16.msra.mxu0 %v335
    %403 = vmatprep.subr.bf16.mxu0 %v334
    %404 = vmatpush2.bf16.msra.mxu0 %v333
    %405 = vmatprep.subr.bf16.mxu0 %v332
    %406 = vmatpush2.bf16.msra.mxu0 %v331
    %407 = vmatprep.subr.bf16.mxu0 %v330
    %408 = vmatpush2.bf16.msra.mxu0 %v329
    %409 = vmatprep.mubr.bf16.mxu0 %v172
    %410 = vmatmul.mubr.bf16.gmra.mxu0 %v171
    %v411 = vpop.f32.mrf.mxu0
    %v412 = vadd.f32 %v210, %v411
    %v413 = vpop.f32.mrf.mxu0
    %v414 = vadd.f32 %v214, %v413
    %v415 = vpop.f32.mrf.mxu0
    %v416 = vpop.f32.mrf.mxu0
    %417 = vdwg.mxu0
    %v418 = vmax.f32 %v412, 0.0
    %v419 = vmax.f32 %v414, 0.0
    %v420 = vpack.c.bf16 %v418, %v418
    %v421 = vpack.c.bf16 %v419, %v419
    %v422 = vld [vmem:[#allocation8] sm:$0xf]
    %v423 = vld [vmem:[#allocation8 + $0x4] sm:$0xf]
    %v424 = vld [vmem:[#allocation8 + $0x8] sm:$0xf]
    %v425 = vld [vmem:[#allocation8 + $0xc] sm:$0xf]
    %v426 = vld [vmem:[#allocation8 + $0x10] sm:$0xf]
    %v427 = vld [vmem:[#allocation8 + $0x14] sm:$0xf]
    %v428 = vld [vmem:[#allocation8 + $0x18] sm:$0xf]
    %v429 = vld [vmem:[#allocation8 + $0x1c] sm:$0xf]
    %v430 = vld [vmem:[#allocation8 + $0x20] sm:$0xf]
    %v431 = vld [vmem:[#allocation8 + $0x24] sm:$0xf]
    %v432 = vld [vmem:[#allocation8 + $0x28] sm:$0xf]
    %v433 = vld [vmem:[#allocation8 + $0x2c] sm:$0xf]
    %v434 = vld [vmem:[#allocation8 + $0x30] sm:$0xf]
    %v435 = vld [vmem:[#allocation8 + $0x34] sm:$0xf]
    %v436 = vld [vmem:[#allocation8 + $0x38] sm:$0xf]
    %v437 = vld [vmem:[#allocation8 + $0x3c] sm:$0xf]
    %v438 = vld [vmem:[#allocation8 + $0x40] sm:$0xf]
    %v439 = vld [vmem:[#allocation8 + $0x44] sm:$0xf]
    %v440 = vld [vmem:[#allocation8 + $0x48] sm:$0xf]
    %v441 = vld [vmem:[#allocation8 + $0x4c] sm:$0xf]
    %v442 = vld [vmem:[#allocation8 + $0x50] sm:$0xf]
    %v443 = vld [vmem:[#allocation8 + $0x54] sm:$0xf]
    %v444 = vld [vmem:[#allocation8 + $0x58] sm:$0xf]
    %v445 = vld [vmem:[#allocation8 + $0x5c] sm:$0xf]
    %v446 = vld [vmem:[#allocation8 + $0x60] sm:$0xf]
    %v447 = vld [vmem:[#allocation8 + $0x64] sm:$0xf]
    %v448 = vld [vmem:[#allocation8 + $0x68] sm:$0xf]
    %v449 = vld [vmem:[#allocation8 + $0x6c] sm:$0xf]
    %v450 = vld [vmem:[#allocation8 + $0x70] sm:$0xf]
    %v451 = vld [vmem:[#allocation8 + $0x74] sm:$0xf]
    %v452 = vld [vmem:[#allocation8 + $0x78] sm:$0xf]
    %v453 = vld [vmem:[#allocation8 + $0x7c] sm:$0xf]
    %v454 = vld [vmem:[%s6] sm:$0x1]
    %v456 = vlaneseq
    %v457 = vshrl.u32 %v456, 7
    %v458 = vsub.s32 0, %v457
    %v459 = vrot.slane %v454, %v458
    %v493 = vunpack.c.l.b16 %v422
    %v494 = vunpack.c.l.b16 %v423
    %v495 = vunpack.c.l.b16 %v424
    %v496 = vunpack.c.l.b16 %v425
    %v497 = vunpack.c.l.b16 %v426
    %v498 = vunpack.c.l.b16 %v427
    %v499 = vunpack.c.l.b16 %v428
    %v500 = vunpack.c.l.b16 %v429
    %v501 = vunpack.c.l.b16 %v430
    %v502 = vunpack.c.l.b16 %v431
    %v503 = vunpack.c.l.b16 %v432
    %v504 = vunpack.c.l.b16 %v433
    %v505 = vunpack.c.l.b16 %v434
    %v506 = vunpack.c.l.b16 %v435
    %v507 = vunpack.c.l.b16 %v436
    %v508 = vunpack.c.l.b16 %v437
    %v509 = vunpack.c.l.b16 %v438
    %v510 = vunpack.c.l.b16 %v439
    %v511 = vunpack.c.l.b16 %v440
    %v512 = vunpack.c.l.b16 %v441
    %v513 = vunpack.c.l.b16 %v442
    %v514 = vunpack.c.l.b16 %v443
    %v515 = vunpack.c.l.b16 %v444
    %v516 = vunpack.c.l.b16 %v445
    %v517 = vunpack.c.l.b16 %v446
    %v518 = vunpack.c.l.b16 %v447
    %v519 = vunpack.c.l.b16 %v448
    %v520 = vunpack.c.l.b16 %v449
    %v521 = vunpack.c.l.b16 %v450
    %v522 = vunpack.c.l.b16 %v451
    %v523 = vunpack.c.l.b16 %v452
    %v524 = vunpack.c.l.b16 %v453
    %v525 = vpack.c.b16 %v494, %v493
    %v526 = vpack.c.b16 %v496, %v495
    %v527 = vpack.c.b16 %v498, %v497
    %v528 = vpack.c.b16 %v500, %v499
    %v529 = vpack.c.b16 %v502, %v501
    %v530 = vpack.c.b16 %v504, %v503
    %v531 = vpack.c.b16 %v506, %v505
    %v532 = vpack.c.b16 %v508, %v507
    %v533 = vpack.c.b16 %v510, %v509
    %v534 = vpack.c.b16 %v512, %v511
    %v535 = vpack.c.b16 %v514, %v513
    %v536 = vpack.c.b16 %v516, %v515
    %v537 = vpack.c.b16 %v518, %v517
    %v538 = vpack.c.b16 %v520, %v519
    %v539 = vpack.c.b16 %v522, %v521
    %v540 = vpack.c.b16 %v524, %v523
    %557 = vmatprep.subr.bf16.mxu0 0
    %558 = vmatpush1.bf16.msra.mxu0 %v532
    %559 = vmatprep.subr.bf16.mxu0 0
    %560 = vmatpush1.bf16.msra.mxu0 %v531
    %561 = vmatprep.subr.bf16.mxu0 0
    %562 = vmatpush1.bf16.msra.mxu0 %v530
    %563 = vmatprep.subr.bf16.mxu0 0
    %564 = vmatpush1.bf16.msra.mxu0 %v529
    %565 = vmatprep.subr.bf16.mxu0 0
    %566 = vmatpush1.bf16.msra.mxu0 %v528
    %567 = vmatprep.subr.bf16.mxu0 0
    %568 = vmatpush1.bf16.msra.mxu0 %v527
    %569 = vmatprep.subr.bf16.mxu0 0
    %570 = vmatpush1.bf16.msra.mxu0 %v526
    %571 = vmatprep.subr.bf16.mxu0 0
    %572 = vmatpush1.bf16.msra.mxu0 %v525
    %573 = vmatprep.subr.bf16.mxu0 0
    %574 = vmatpush2.bf16.msra.mxu0 %v540
    %575 = vmatprep.subr.bf16.mxu0 0
    %576 = vmatpush2.bf16.msra.mxu0 %v539
    %577 = vmatprep.subr.bf16.mxu0 0
    %578 = vmatpush2.bf16.msra.mxu0 %v538
    %579 = vmatprep.subr.bf16.mxu0 0
    %580 = vmatpush2.bf16.msra.mxu0 %v537
    %581 = vmatprep.subr.bf16.mxu0 0
    %582 = vmatpush2.bf16.msra.mxu0 %v536
    %583 = vmatprep.subr.bf16.mxu0 0
    %584 = vmatpush2.bf16.msra.mxu0 %v535
    %585 = vmatprep.subr.bf16.mxu0 0
    %586 = vmatpush2.bf16.msra.mxu0 %v534
    %587 = vmatprep.subr.bf16.mxu0 0
    %588 = vmatpush2.bf16.msra.mxu0 %v533
    %589 = vmatprep.mubr.bf16.mxu0 %v421
    %590 = vmatmul.mubr.bf16.gmra.mxu0 %v420
    %v591 = vpop.f32.mrf.mxu0
    %v592 = vadd.f32 %v459, %v591
    %v593 = vpop.f32.mrf.mxu0
    %v594 = vpop.f32.mrf.mxu0
    %v595 = vpop.f32.mrf.mxu0
    %596 = vdwg.mxu0
    %v597 = vlaneseq
    %v598 = vand.u32 %v597, 127
    %v599 = vtanh.pop %v592
    %v600 = vld [vmem:[%s7] sm:$0x1]
    %v602 = vlaneseq
    %v603 = vshrl.u32 %v602, 7
    %v604 = vsub.s32 0, %v603
    %v605 = vrot.slane %v600, %v604
    %v607 = vmul.f32 %v599, %v605
    %v608 = vld [vmem:[%s8] sm:$0x1]
    %v610 = vlaneseq
    %v611 = vshrl.u32 %v610, 7
    %v612 = vsub.s32 0, %v611
    %v613 = vrot.slane %v608, %v612
    %v615 = vadd.f32 %v607, %v613
    %vm616 = vcmp.lt.s32.totalorder %v598, 4
    %v617 = vsel %vm616, %v615, %v592
    %618 = vst [vmem:[#allocation10] sm:$0xff] %v617
    // Predicated region
    $region54: #{tpu_custom_call.1} parent=1 // pred_check
      _
    $region55: #{tpu_custom_call.1} parent=1 // pred_check_branch
      %620 = sbr.rel (0) target = $region57
    $region56: #{tpu_custom_call.1} parent=1 // pred_region
      %s622 = ssub.s32 128, 128
      %623 = vsyncadd [#allocation4], %s622
      %s625 = sshll.u32 [#allocation10], 4
      %s626 = int_to_ptr.vmem [resolvable:$true] %s625
      %628 = dma.vmem_to_hbm [thread:$0]  %s626, 128, %s9, [#allocation4]
    $region57: #{tpu_custom_call.1} parent=1 // pred_fallthru
      _
    // Predicated region
    $region58: #{tpu_custom_call.1} parent=1 // pred_check
      _
    $region59: #{tpu_custom_call.1} parent=1 // pred_check_branch
      %630 = sbr.rel (0) target = $region61
    $region60: #{tpu_custom_call.1} parent=1 // pred_region
      %631 = dma.done [#allocation4], 128
    $region61: #{tpu_custom_call.1} parent=1 // pred_fallthru
      _
    %632 = vsyncpa [#allocation3], 1
    %633 = vsyncpa [#allocation6], 1
    %634 = vsyncpa [#allocation9], 1
    %635 = vsyncpa [#allocation4], 1

</llo_original>
